<compile_context>
chip_gen: v7x
topology: tpu7x:2x2x1
jax: 0.10.0
libtpu: 0.0.40
codegen_flags: <defaults>
</compile_context>

<pallas_src>
import jax
import jax.numpy as jnp
from jax.experimental import pallas as pl
from jax.experimental.pallas import tpu as pltpu


_LANE_CANDIDATES = (2048, 1024, 512, 256, 128)   # lane-dense last-dim choices
_MIN_PALLAS_ELEMENTS = 256 * 1024                # below this, fused XLA op wins
_TARGET_OUT_BYTES = 8 * 1024 * 1024              # ~8 MiB f32 output per tile
_FOOTPRINT_CAP_BYTES = 40 * 1024 * 1024          # 2*(in+out) double-buffered cap
_VMEM_LIMIT_CEIL = 48 * 1024 * 1024              # <= v7x 64 MiB physical VMEM


def _normalise_kernel(scale_ref, bias_ref, x_ref, o_ref):
    """One grid step: a (1, TR, L) tile of channel c = program_id(1).

    scale_ref / bias_ref : (C,) f32 scalar-prefetch refs (SMEM)
    x_ref                : (1, TR, L) native-dtype VMEM tile (upcast in-register)
    o_ref                : (1, TR, L) f32 VMEM tile
    """
    c = pl.program_id(1)
    s = scale_ref[c]
    b = bias_ref[c]
    o_ref[...] = x_ref[...].astype(jnp.float32) * s + b


def _pick_row_tile(rows, tr_max):
    """Row tile <= tr_max; prefer a divisor of rows (no ragged tail), 32-aligned."""
    tr_max = max(1, int(tr_max))
    if tr_max >= rows:
        return rows                        # full dim — always layout-legal
    divisors = [d for d in range(1, tr_max + 1) if rows % d == 0]
    best = max(divisors, key=lambda d: (d % 32 == 0, d % 8 == 0, d))
    if best >= max(32, tr_max // 4):
        return best
    # No reasonably sized divisor: accept a masked final tile, keep 32-aligned
    # so packed sub-32-bit inputs never need relayout.
    return max(32, (tr_max // 32) * 32) if tr_max >= 32 else tr_max


def normalise_from_dataset(x, mean_ds, std_ds, mean=0.0, std=1.0,
                           forward_video=False, chan_idx=None,
                           prefer_pallas=None):
    """JAX/Pallas equivalent of NormaliseFromDataset.forward.

    x: (C, H, W) image or (C, T, H, W) video (forward_video=True), any real
       dtype; output is float32 (matches PyTorch's `tensor.float()`).
    prefer_pallas: None = auto (size-based), True/False forces the path.
       Note: even with prefer_pallas=True the fused-XLA path is used when the
       per-channel element count is not a multiple of 128 (layout-illegal for
       a lane-dense Pallas tiling) — documented fallback, not an error.
    """
    mean_ds = jnp.asarray(mean_ds, jnp.float32).reshape(-1)
    std_ds = jnp.asarray(std_ds, jnp.float32).reshape(-1)

    num_channels = x.shape[0]
    if num_channels == 1:
        # Single-channel input uses the dataset stats of channel `chan_idx`
        # (default 2), exactly like the PyTorch module.
        if chan_idx is None:
            chan_idx = 2
        mean_use = mean_ds[chan_idx].reshape(1)
        std_use = std_ds[chan_idx].reshape(1)
    else:
        mean_use = mean_ds
        std_use = std_ds

    # Fold ((x - mean_ds) / std_ds) * std + mean into one multiply-add.
    # (Not bit-identical to the two-step PyTorch formula; well within fp32 tol.)
    scale = jnp.float32(std) / std_use                 # (C,)
    bias = jnp.float32(mean) - mean_use * scale        # (C,)

    # forward_video only changes how PyTorch writes the broadcast; the op is
    # element-wise over everything but the channel axis, so flatten it.
    orig_shape = x.shape
    C = orig_shape[0]
    n_per_chan = 1
    for d in orig_shape[1:]:
        n_per_chan *= d
    total = C * n_per_chan

    # Lane-dense layout: view each channel plane as (rows, L), L % 128 == 0.
    lane = next((l for l in _LANE_CANDIDATES if n_per_chan % l == 0), None)
    use_pallas = (lane is not None) and (
        prefer_pallas if prefer_pallas is not None
        else total >= _MIN_PALLAS_ELEMENTS)

    if not use_pallas:
        # Tiny or 128-unfriendly shapes: fused XLA elementwise is faster than
        # kernel launch + per-grid-step overhead.
        bshape = (C,) + (1,) * (x.ndim - 1)
        return (x.astype(jnp.float32) * scale.reshape(bshape)
                + bias.reshape(bshape))

    rows = n_per_chan // lane
    x3 = x.reshape(C, rows, lane)          # pure metadata reshape, no HBM copy

    itemsize = jnp.dtype(x.dtype).itemsize
    # Row tile: ~8 MiB of f32 output, AND double-buffered (in+out) footprint
    # capped so it fits v7x's 64 MiB VMEM with headroom. Narrow inputs (u8)
    # automatically allow relatively larger out-tiles under the cap.
    tr_out = _TARGET_OUT_BYTES // (lane * 4)
    tr_cap = _FOOTPRINT_CAP_BYTES // (2 * lane * (4 + itemsize))
    tr = _pick_row_tile(rows, min(tr_out, tr_cap))
    n_row_tiles = pl.cdiv(rows, tr)

    # Explicit VMEM limit: large tiles overshoot v5e's 16 MiB scoped default;
    # stay under v7x's 64 MiB physical. (v5e/v6e have 128 MiB physical.)
    footprint = 2 * tr * lane * (4 + itemsize)
    vmem_limit = int(min(_VMEM_LIMIT_CEIL,
                         max(footprint + (4 << 20), 16 << 20)))

    in_bytes = total * itemsize
    out_bytes = total * 4

    # Grid = (row_tiles, C): leading axis is the big, evenly splittable one so
    # v7x's 2 TensorCores get a balanced split even for C=3 RGB.
    grid_spec = pltpu.PrefetchScalarGridSpec(
        num_scalar_prefetch=2,                       # scale, bias -> SMEM once
        grid=(n_row_tiles, C),
        in_specs=[
            pl.BlockSpec((1, tr, lane), lambda r, c, scale, bias: (c, r, 0)),
        ],
        out_specs=pl.BlockSpec((1, tr, lane), lambda r, c, scale, bias: (c, r, 0)),
    )

    out = pl.pallas_call(
        _normalise_kernel,
        out_shape=jax.ShapeDtypeStruct((C, rows, lane), jnp.float32),
        grid_spec=grid_spec,
        compiler_params=pltpu.CompilerParams(
            dimension_semantics=("parallel", "parallel"),
            vmem_limit_bytes=vmem_limit),
        cost_estimate=pl.CostEstimate(
            flops=2 * total, transcendentals=0,
            bytes_accessed=in_bytes + out_bytes),
    )(scale, bias, x3)

    return out.reshape(orig_shape)


if __name__ == "__main__":
    key = jax.random.PRNGKey(0)
    k1, k2, k3, k4, k5 = jax.random.split(key, 5)

    # Dataset statistics (module __init__ parameters).
    mean_ds = jnp.array([0.485, 0.456, 0.406, 0.5], dtype=jnp.float32)
    std_ds = jnp.array([0.229, 0.224, 0.225, 0.25], dtype=jnp.float32)
    tgt_mean, tgt_std = 0.5, 2.0

    def ref(x, m, s):
        bshape = (m.shape[0],) + (1,) * (x.ndim - 1)
        return ((x.astype(jnp.float32) - m.reshape(bshape))
                / s.reshape(bshape)) * tgt_std + tgt_mean

    # Case 1: image (C, H, W) f32, Pallas path (lane-dense W = 128).
    x_img = jax.random.uniform(k1, (4, 32, 128), dtype=jnp.float32)
    out_img = jax.block_until_ready(
        normalise_from_dataset(x_img, mean_ds, std_ds, mean=tgt_mean,
                               std=tgt_std, prefer_pallas=True))
    assert out_img.shape == x_img.shape and out_img.dtype == jnp.float32
    assert jnp.allclose(out_img, ref(x_img, mean_ds, std_ds),
                        rtol=1e-5, atol=1e-4)

    # Case 2: video (C, T, H, W) uint8 input, in-kernel upcast, Pallas path.
    x_vid = jax.random.randint(k2, (4, 8, 16, 128), 0, 256,
                               dtype=jnp.int32).astype(jnp.uint8)
    out_vid = jax.block_until_ready(
        normalise_from_dataset(x_vid, mean_ds, std_ds, mean=tgt_mean,
                               std=tgt_std, forward_video=True,
                               prefer_pallas=True))
    assert jnp.allclose(out_vid, ref(x_vid, mean_ds, std_ds),
                        rtol=1e-5, atol=1e-2)

    # Case 3: single-channel (1, H, W) bf16 input, default chan_idx=2.
    x_1c = jax.random.uniform(k3, (1, 32, 128),
                              dtype=jnp.float32).astype(jnp.bfloat16)
    out_1c = jax.block_until_ready(
        normalise_from_dataset(x_1c, mean_ds, std_ds, mean=tgt_mean,
                               std=tgt_std, prefer_pallas=True))
    ref_1c = ((x_1c.astype(jnp.float32) - mean_ds[2]) / std_ds[2]
              ) * tgt_std + tgt_mean
    assert jnp.allclose(out_1c, ref_1c, rtol=1e-5, atol=1e-4)

    # Case 4: RGB image with a row count that is not a multiple of 8
    # (3, 56, 128) -> rows=56, full-extent row tile (still unmasked stores).
    x_rgb = jax.random.uniform(k4, (3, 56, 128), dtype=jnp.float32)
    out_rgb = jax.block_until_ready(
        normalise_from_dataset(x_rgb, mean_ds[:3], std_ds[:3], mean=tgt_mean,
                               std=tgt_std, prefer_pallas=True))
    assert jnp.allclose(out_rgb, ref(x_rgb, mean_ds[:3], std_ds[:3]),
                        rtol=1e-5, atol=1e-4)

    # Case 5: tiny image (4, 16, 16) -> auto fallback to fused jnp path.
    x_tiny = jax.random.uniform(k5, (4, 16, 16), dtype=jnp.float32)
    out_tiny = jax.block_until_ready(
        normalise_from_dataset(x_tiny, mean_ds, std_ds,
                               mean=tgt_mean, std=tgt_std))
    assert jnp.allclose(out_tiny, ref(x_tiny, mean_ds, std_ds),
                        rtol=1e-5, atol=1e-4)

    print("KERNEL_OK")
</pallas_src>

<mosaic_0001>
module attributes {stable_mosaic.version = 11 : i64} {
  func.func @_normalise_kernel(%arg0: i32, %arg1: i32, %arg2: memref<4xf32, #tpu.memory_space<smem>>, %arg3: memref<4xf32, #tpu.memory_space<smem>>, %arg4: memref<1x2x2048xf32, #tpu.memory_space<vmem>>, %arg5: memref<1x2x2048xf32, #tpu.memory_space<vmem>>) attributes {dimension_semantics = [#tpu.dimension_semantics<parallel>, #tpu.dimension_semantics<parallel>], iteration_bounds = array<i64: 1, 4>, scalar_prefetch = 2 : i64, scratch_operands = 0 : i64, tpu.core_type = #tpu.core_type<tc>, window_params = [{transform_indices = @transform_0, window_bounds = array<i64: 1, 2, 2048>}, {transform_indices = @transform_1, window_bounds = array<i64: 1, 2, 2048>}]} {
    %0 = arith.index_cast %arg1 : i32 to index
    %1 = memref.load %arg2[%0] : memref<4xf32, #tpu.memory_space<smem>>
    %2 = arith.index_cast %arg1 : i32 to index
    %3 = memref.load %arg3[%2] : memref<4xf32, #tpu.memory_space<smem>>
    %c0 = arith.constant 0 : index
    %c0_0 = arith.constant 0 : index
    %c0_1 = arith.constant 0 : index
    %4 = vector.load %arg4[%c0, %c0_0, %c0_1] : memref<1x2x2048xf32, #tpu.memory_space<vmem>>, vector<1x2x2048xf32>
    %5 = vector.broadcast %1 : f32 to vector<1x2x2048xf32>
    %6 = arith.mulf %4, %5 : vector<1x2x2048xf32>
    %7 = vector.broadcast %3 : f32 to vector<1x2x2048xf32>
    %8 = arith.addf %6, %7 : vector<1x2x2048xf32>
    %c0_2 = arith.constant 0 : index
    %c0_3 = arith.constant 0 : index
    %c0_4 = arith.constant 0 : index
    %9 = vector.load %arg5[%c0_2, %c0_3, %c0_4] : memref<1x2x2048xf32, #tpu.memory_space<vmem>>, vector<1x2x2048xf32>
    tpu.vector_store %arg5[%c0_2, %c0_3, %c0_4], %8 {strides = array<i32>} : memref<1x2x2048xf32, #tpu.memory_space<vmem>>, vector<1x2x2048xf32>,
    return
  }
  func.func @transform_0(%arg0: i32, %arg1: i32, %arg2: memref<4xf32, #tpu.memory_space<smem>>, %arg3: memref<4xf32, #tpu.memory_space<smem>>) -> (i32, i32, i32) {
    %c0_i32 = arith.constant 0 : i32
    %c0_i32_0 = arith.constant 0 : i32
    return %arg1, %arg0, %c0_i32 : i32, i32, i32
  }
  func.func @transform_1(%arg0: i32, %arg1: i32, %arg2: memref<4xf32, #tpu.memory_space<smem>>, %arg3: memref<4xf32, #tpu.memory_space<smem>>) -> (i32, i32, i32) {
    %c0_i32 = arith.constant 0 : i32
    %c0_i32_0 = arith.constant 0 : i32
    return %arg1, %arg0, %c0_i32 : i32, i32, i32
  }
}

</mosaic_0001>

<llo_original>
// kernel: tpu_custom_call.1
$region0: #{tpu_custom_call.1}
  #allocation0 [shape = 'u32[]', space=smem, size = 0x4, offset = 0x4, fixed_abs, tag = 'smem constant byte address 0x4 - core index']
  #allocation1 [shape = 'u32[144,128]{1,0:T(1,128)}', space=vmem, size = 0x12000, scoped, tag = 'internal scratch']
  #allocation2 [shape = 's32[1]{0}', space=sflag, size = 0x4, scoped, tag = 'scoped memory for tpu_custom_call.1']
  #allocation3 [shape = 'u8[512]{0}', space=smem, size = 0x200, scoped, tag = 'prefetched SMEM operand 0']
  #allocation4 [shape = 'u8[512]{0}', space=smem, size = 0x200, scoped, tag = 'prefetched SMEM operand 1']
  %s0 = inlined_call_operand.hbm [shape: f32[4], index: 0, kind: input, shape index: {}]
  %s1 = inlined_call_operand.vmem [shape: f32[4], index: 1, kind: input, shape index: {}]
  %s2 = inlined_call_operand.hbm [shape: f32[4,2,2048], index: 2, kind: input, shape index: {}]
  %s3 = inlined_call_operand.hbm [shape: f32[4,2,2048], index: 3, kind: output, shape index: {}]
  %s4 = sld [smem:[#allocation0]]
  $region41: #{tpu_custom_call.1} parent=0
    _
  %s6 = ssub.s32 1, %s4
  %s7 = scalar_select 0, %s6, %s4
  %9 = dma.hbm_to_smem %s0, 16, [#allocation3], [#allocation2]
  %s10 = sshll.u32 %s1, 4
  %s11 = int_to_ptr.vmem [resolvable:$true] %s10
  %13 = dma.vmem_to_smem %s11, 16, [#allocation4], [#allocation2]
  %14 = dma.done [#allocation2], 32
  %15 = sfence
  $region1: #{tpu_custom_call.1} parent=0
    #allocation5 [shape = 'u8[32768]{0}', space=vmem, size = 0x8000, scoped, tag = 'input window, operand 2']
    #allocation6 [shape = 's32[2]{0}', space=sflag, size = 0x8, scoped, tag = 'scoped memory for tpu_custom_call.1']
    #allocation7 [shape = 's32[2]{0}', space=sflag, size = 0x8, scoped, tag = 'scoped memory for tpu_custom_call.1']
    #allocation8 [shape = 'u8[32768]{0}', space=vmem, size = 0x8000, scoped, tag = 'output window, operand 0']
    %16 = vsyncpa [#allocation6], 0
    %s17 = scalar_lea.sflag [#allocation6], 1
    %18 = vsyncpa %s17, 0
    %19 = vsyncpa [#allocation7], 0
    %s20 = scalar_lea.sflag [#allocation7], 1
    %21 = vsyncpa %s20, 0
    loop: start=0, step=1, limit=6
    $region2: #{tpu_custom_call.1} parent=1 // loop_pre_header
      _
    $region3: #{tpu_custom_call.1} parent=1 // loop_header
      %s23 = sphi 0, %s27
      %p24 = scmp.ge.s32.totalorder %s23, 6
      %s30 = sphi 0, %s42
      %s31 = sphi 0, %s38
      %s32 = sphi 0, %s30
      %s33 = sphi 0, %s31
      %s34 = sphi 0, %s32
      %s35 = sphi 0, %s33
      %s47 = sphi 0, %s49
      %s50 = sphi 0, %s47
      %s51 = sphi 0, %s50
      %s67 = sphi 0, %s51
      %s75 = sphi 0, %s77
      %s78 = sphi 0, %s75
      %s79 = sphi 0, %s78
      %s95 = sphi 0, %s79
    $region4: #{tpu_custom_call.1} parent=1 // loop_header_branch
      %26 = sbr.rel (%p24) target = $region8
    $region5: #{tpu_custom_call.1} parent=1 // loop_body
      %s28 = ssub.s32 %s23, 1
      %s29 = ssub.s32 %s23, 2
      %s36 = sadd.s32 1, %s31
      %p37 = scmp.ge.s32.totalorder %s36, 4
      %s38 = scalar_select %p37, 0, %s36
      %s39 = sadd.s32 1, %s30
      %s40 = scalar_select %p37, %s39, %s30
      %p41 = scmp.ge.s32.totalorder %s40, 1
      %s42 = scalar_select %p41, 0, %s40
      %s43 = ssub.s32 %s31, %s38
      %s44 = ssub.s32 %s30, %s42
      %s45 = sor.u32 %s43, %s44
      %p46 = scmp.eq.s32.totalorder %s45, 0
      %s48 = sadd.s32 %s47, 1
      %s49 = scalar_select %p46, %s47, %s48
      %p52 = pneg %p46
      %p53 = scmp.eq.s32.totalorder %s23, 3
      %p54 = por %p52, %p53
      %p55 = scmp.ne.s32.totalorder %s47, %s50
      %p56 = scmp.eq.s32.totalorder %s23, 0
      %p57 = por %p55, %p56
      %p58 = scmp.ne.s32.totalorder %s47, %s50
      %p59 = scmp.eq.s32.totalorder %s28, 3
      %p60 = por %p58, %p59
      %p61 = scmp.ne.s32.totalorder %s50, %s51
      %p62 = scmp.eq.s32.totalorder %s28, 0
      %p63 = por %p61, %p62
      %p64 = scmp.ne.s32.totalorder %s50, %s51
      %p65 = scmp.eq.s32.totalorder %s29, 3
      %p66 = por %p64, %p65
      %p68 = scmp.ne.s32.totalorder %s51, %s67
      %p69 = scmp.eq.s32.totalorder %s29, 0
      %p70 = por %p68, %p69
      %s71 = ssub.s32 %s31, %s38
      %s72 = ssub.s32 %s30, %s42
      %s73 = sor.u32 %s71, %s72
      %p74 = scmp.eq.s32.totalorder %s73, 0
      %s76 = sadd.s32 %s75, 1
      %s77 = scalar_select %p74, %s75, %s76
      %p80 = pneg %p74
      %p81 = scmp.eq.s32.totalorder %s23, 3
      %p82 = por %p80, %p81
      %p83 = scmp.ne.s32.totalorder %s75, %s78
      %p84 = scmp.eq.s32.totalorder %s23, 0
      %p85 = por %p83, %p84
      %p86 = scmp.ne.s32.totalorder %s75, %s78
      %p87 = scmp.eq.s32.totalorder %s28, 3
      %p88 = por %p86, %p87
      %p89 = scmp.ne.s32.totalorder %s78, %s79
      %p90 = scmp.eq.s32.totalorder %s28, 0
      %p91 = por %p89, %p90
      %p92 = scmp.ne.s32.totalorder %s78, %s79
      %p93 = scmp.eq.s32.totalorder %s29, 3
      %p94 = por %p92, %p93
      %p96 = scmp.ne.s32.totalorder %s79, %s95
      %p97 = scmp.eq.s32.totalorder %s29, 0
      %p98 = por %p96, %p97
      %p99 = scmp.le.s32.totalorder 1, %s23
      %p100 = scmp.lt.s32.totalorder %s23, 5
      %p101 = pnand %p99, %p100
      %p102 = pneg %p101
      // Predicated region
      $region9: #{tpu_custom_call.1} parent=5 // pred_check
        _
      $region10: #{tpu_custom_call.1} parent=5 // pred_check_branch
        %104 = sbr.rel (%p101) target = $region12
      $region11: #{tpu_custom_call.1} parent=5 // pred_region
        %s105 = ssub.s32 %s23, 1
      $region12: #{tpu_custom_call.1} parent=5 // pred_fallthru
        _
      %p106 = scmp.lt.s32.totalorder %s23, 4
      // Predicated region
      $region13: #{tpu_custom_call.1} parent=5 // pred_check
        %p107 = pneg %p106
      $region14: #{tpu_custom_call.1} parent=5 // pred_check_branch
        %109 = sbr.rel (%p107) target = $region16
      $region15: #{tpu_custom_call.1} parent=5 // pred_region
        // Predicated region
        $region17: #{tpu_custom_call.1} parent=15 // pred_check
          %p110 = pneg %p57
        $region18: #{tpu_custom_call.1} parent=15 // pred_check_branch
          %112 = sbr.rel (%p110) target = $region20
        $region19: #{tpu_custom_call.1} parent=15 // pred_region
          %s113 = sand.u32 %s47, 1
          %s114 = scalar_lea.sflag [#allocation6], %s113
          %s115 = sand.u32 %s47, 1
          %s116 = smul.addr %s115, 32
          %s117 = scalar_lea.vmem [#allocation5], %s116
          %s119 = ssub.s32 512, 512
          %120 = vsyncadd %s114, %s119
          %s121 = smul.addr %s30, 16
          %s122 = smul.addr %s31, 16
          %s123 = sadd.s32 %s121, %s122
          %s124 = smul.addr %s123, 32
          %s125 = scalar_lea.hbm %s2, %s124
          %s127 = sshll.u32 %s117, 4
          %s128 = int_to_ptr.vmem [resolvable:$true] %s127
          %130 = dma.hbm_to_vmem [thread:$0]  %s125, 512, %s128, %s114
        $region20: #{tpu_custom_call.1} parent=15 // pred_fallthru
          _
      $region16: #{tpu_custom_call.1} parent=5 // pred_fallthru
        _
      %p131 = scmp.le.s32.totalorder 1, %s23
      %p132 = scmp.lt.s32.totalorder %s23, 5
      %p133 = pnand %p131, %p132
      %p134 = pneg %p133
      // Predicated region
      $region21: #{tpu_custom_call.1} parent=5 // pred_check
        _
      $region22: #{tpu_custom_call.1} parent=5 // pred_check_branch
        %136 = sbr.rel (%p133) target = $region24
      $region23: #{tpu_custom_call.1} parent=5 // pred_region
        %s137 = ssub.s32 %s23, 1
        %s138 = sand.u32 %s50, 1
        %s139 = scalar_lea.sflag [#allocation6], %s138
        %s140 = sand.u32 %s50, 1
        %s141 = smul.addr %s140, 32
        %s142 = scalar_lea.vmem [#allocation5], %s141
        // Predicated region
        $region25: #{tpu_custom_call.1} parent=23 // pred_check
          %p143 = pneg %p63
        $region26: #{tpu_custom_call.1} parent=23 // pred_check_branch
          %145 = sbr.rel (%p143) target = $region28
        $region27: #{tpu_custom_call.1} parent=23 // pred_region
          %146 = dma.done %s139, 512
        $region28: #{tpu_custom_call.1} parent=23 // pred_fallthru
          _
        %s147 = sand.u32 %s50, 1
        %s148 = scalar_lea.sflag [#allocation6], %s147
        %s149 = sand.u32 %s50, 1
        %s150 = smul.addr %s149, 32
        %s151 = scalar_lea.vmem [#allocation5], %s150
        %p152 = pneg %p63
        %p153 = pneg %p60
        %p154 = pneg %p91
        %p155 = pneg %p88
        %s156 = sand.u32 %s78, 1
        %s157 = scalar_lea.sflag [#allocation7], %s156
        %s158 = sand.u32 %s78, 1
        %s159 = smul.addr %s158, 32
        %s160 = scalar_lea.vmem [#allocation8], %s159
        %s161 = sld [smem:[#allocation3 + %s33]]
        %s162 = sld [smem:[#allocation4 + %s33]]
        %v163 = vld [vmem:[%s142] sm:$0xff]
        %v164 = vld [vmem:[%s142 + $0x8] sm:$0xff]
        %v165 = vld [vmem:[%s142 + $0x10] sm:$0xff]
        %v166 = vld [vmem:[%s142 + $0x18] sm:$0xff]
        %v167 = vstv %s161
        %v168 = vmul.f32 %v163, %v167
        %v169 = vmul.f32 %v164, %v167
        %v170 = vmul.f32 %v165, %v167
        %v171 = vmul.f32 %v166, %v167
        %v172 = vstv %s162
        %v173 = vadd.f32 %v168, %v172
        %v174 = vadd.f32 %v169, %v172
        %v175 = vadd.f32 %v170, %v172
        %v176 = vadd.f32 %v171, %v172
        %177 = vst [vmem:[%s160] sm:$0xff] %v173
        %178 = vst [vmem:[%s160 + $0x8] sm:$0xff] %v174
        %179 = vst [vmem:[%s160 + $0x10] sm:$0xff] %v175
        %180 = vst [vmem:[%s160 + $0x18] sm:$0xff] %v176
        %s181 = sand.u32 %s78, 1
        %s182 = scalar_lea.sflag [#allocation7], %s181
        %s183 = sand.u32 %s78, 1
        %s184 = smul.addr %s183, 32
        %s185 = scalar_lea.vmem [#allocation8], %s184
        // Predicated region
        $region29: #{tpu_custom_call.1} parent=23 // pred_check
          %p186 = pneg %p88
        $region30: #{tpu_custom_call.1} parent=23 // pred_check_branch
          %188 = sbr.rel (%p186) target = $region32
        $region31: #{tpu_custom_call.1} parent=23 // pred_region
          %s190 = ssub.s32 512, 512
          %191 = vsyncadd %s182, %s190
          %s192 = smul.addr %s32, 16
          %s193 = smul.addr %s33, 16
          %s194 = sadd.s32 %s192, %s193
          %s195 = smul.addr %s194, 32
          %s196 = scalar_lea.hbm %s3, %s195
          %s198 = sshll.u32 %s185, 4
          %s199 = int_to_ptr.vmem [resolvable:$true] %s198
          %201 = dma.vmem_to_hbm [thread:$0]  %s199, 512, %s196, %s182
        $region32: #{tpu_custom_call.1} parent=23 // pred_fallthru
          _
      $region24: #{tpu_custom_call.1} parent=5 // pred_fallthru
        _
      %p202 = scmp.le.s32.totalorder 2, %s23
      // Predicated region
      $region33: #{tpu_custom_call.1} parent=5 // pred_check
        %p203 = pneg %p202
      $region34: #{tpu_custom_call.1} parent=5 // pred_check_branch
        %205 = sbr.rel (%p203) target = $region36
      $region35: #{tpu_custom_call.1} parent=5 // pred_region
        %s206 = ssub.s32 %s23, 2
        // Predicated region
        $region37: #{tpu_custom_call.1} parent=35 // pred_check
          %p207 = pneg %p94
        $region38: #{tpu_custom_call.1} parent=35 // pred_check_branch
          %209 = sbr.rel (%p207) target = $region40
        $region39: #{tpu_custom_call.1} parent=35 // pred_region
          %s210 = sand.u32 %s79, 1
          %s211 = scalar_lea.sflag [#allocation7], %s210
          %s212 = sand.u32 %s79, 1
          %s213 = smul.addr %s212, 32
          %s214 = scalar_lea.vmem [#allocation8], %s213
          %215 = dma.done %s211, 512
        $region40: #{tpu_custom_call.1} parent=35 // pred_fallthru
          _
      $region36: #{tpu_custom_call.1} parent=5 // pred_fallthru
        _
    $region6: #{tpu_custom_call.1} parent=1 // loop_footer
      %s27 = sadd.s32 1, %s23
    $region7: #{tpu_custom_call.1} parent=1 // loop_footer_branch
      %22 = sbr.rel target = $region3
    $region8: #{tpu_custom_call.1} parent=1 // loop_exit
      _
    %216 = vsyncpa [#allocation6], 1
    %s217 = scalar_lea.sflag [#allocation6], 1
    %218 = vsyncpa %s217, 1
    %219 = vsyncpa [#allocation7], 1
    %s220 = scalar_lea.sflag [#allocation7], 1
    %221 = vsyncpa %s220, 1

</llo_original>
